<compile_context>
chip_gen: v5e
topology: v5e:2x2
jax: 0.10.0
libtpu: 0.0.40
codegen_flags: <defaults>
</compile_context>

<pallas_src>
import jax
import jax.numpy as jnp
from jax.experimental import pallas as pl
from jax.experimental.pallas import tpu as pltpu


def _round_up(n, m):
    return m * pl.cdiv(n, m)


def _mlp_kernel(xT_ref, w1t_ref, b1_ref, w2_ref, b2_ref, oT_ref):
    """One batch tile of StopPolicyNet in the transposed (lane-dense) layout.

    xT_ref : (3, TB)   inputs, batch on the lane axis
    w1t_ref: (64, 3)   layer-1 weight (torch layout: out_features x in_features)
    b1_ref : (64, 1)   layer-1 bias (column)
    w2_ref : (64, 1)   layer-2 weight (column)
    b2_ref : (1, 1)    layer-2 bias (SMEM scalar)
    oT_ref : (1, TB)   output, batch on the lane axis
    """
    x = xT_ref[...]                                        # (3, TB)
    w1t = w1t_ref[...]                                     # (64, 3)

    # Layer 1: K=3 matmul would waste the MXU -> 3 VPU broadcast-FMAs.
    h = b1_ref[...] + w1t[:, 0:1] * x[0:1, :]              # (64, TB)
    h = h + w1t[:, 1:2] * x[1:2, :]
    h = h + w1t[:, 2:3] * x[2:3, :]
    h = jnp.maximum(h, 0.0)                                # ReLU

    # Layer 2: N=1 -> VPU multiply + XLU sublane reduce over hidden=64.
    out = jnp.sum(h * w2_ref[...], axis=0, keepdims=True)  # (1, TB)
    oT_ref[...] = (out + b2_ref[0, 0]).astype(oT_ref.dtype)


def stop_policy_net_t(xT, w1, b1, w2, b2, *, tile_b=16384):
    """Lane-dense entry point.

    xT: (3, B) float32 (batch on the lane axis)   -> returns (1, B) float32
    w1: (3, 64), b1: (64,), w2: (64, 1), b2: (1,)  (torch weights transposed)

    Keeping activations in this layout across calls removes the transpose/pad
    HBM pass entirely.
    """
    assert tile_b % 128 == 0, "tile_b must be a multiple of 128 (lane width)"
    B = xT.shape[1]

    # Tile sizing:
    #  * as large as possible (amortize ~0.35 us per grid step),
    #  * multiple of 128 lanes (unmasked lane-dense stores),
    #  * >= 2 grid steps whenever B > 128 so v7x megacore shards across TCs.
    b_lanes = _round_up(B, 128)
    if b_lanes >= 256:
        tb = max(128, min(tile_b, _round_up(pl.cdiv(b_lanes, 2), 128)))
    else:
        tb = 128
    Bp = _round_up(B, tb)

    xTp = xT.astype(jnp.float32)
    if Bp != B:
        # Padded lanes produce garbage (ReLU(b1).w2 + b2); sliced off below.
        xTp = jnp.pad(xTp, ((0, 0), (0, Bp - B)))

    w1t = w1.T.astype(jnp.float32).reshape(64, 3)   # (64, 3)
    b1c = b1.astype(jnp.float32).reshape(64, 1)     # (64, 1)
    w2c = w2.astype(jnp.float32).reshape(64, 1)     # (64, 1)
    b2s = b2.astype(jnp.float32).reshape(1, 1)      # (1, 1) scalar in SMEM

    outT = pl.pallas_call(
        _mlp_kernel,
        out_shape=jax.ShapeDtypeStruct((1, Bp), jnp.float32),
        grid=(Bp // tb,),
        in_specs=[
            pl.BlockSpec((3, tb), lambda i: (0, i)),        # x tile, lane-dense
            pl.BlockSpec((64, 3), lambda i: (0, 0)),        # weights stay resident
            pl.BlockSpec((64, 1), lambda i: (0, 0)),
            pl.BlockSpec((64, 1), lambda i: (0, 0)),
            pl.BlockSpec((1, 1), lambda i: (0, 0),
                         memory_space=pltpu.MemorySpace.SMEM),  # scalar bias
        ],
        out_specs=pl.BlockSpec((1, tb), lambda i: (0, i)),  # lane-dense output
        compiler_params=pltpu.CompilerParams(
            dimension_semantics=("parallel",)),             # megacore on v7x
    )(xTp, w1t, b1c, w2c, b2s)

    return outT[:, :B]


def stop_policy_net(x, w1, b1, w2, b2, *, tile_b=16384, min_pallas_batch=0):
    """Forward pass of StopPolicyNet with the torch-style (B, 3) input.

    x : (B, 3)  float32
    w1: (3, 64) float32   (torch weight.T)
    b1: (64,)   float32
    w2: (64, 1) float32   (torch weight.T)
    b2: (1,)    float32
    returns (B, 1) float32

    For tiny batches the layout plumbing + launch dominate the sub-us kernel;
    set min_pallas_batch (e.g. 512) in production to fall back to plain XLA.
    """
    B = x.shape[0]
    if B < min_pallas_batch:
        h = jnp.maximum(x @ w1 + b1, 0.0)
        return h @ w2 + b2
    outT = stop_policy_net_t(x.astype(jnp.float32).T, w1, b1, w2, b2,
                             tile_b=tile_b)
    return outT.reshape(B, 1)


def _reference(x, w1, b1, w2, b2):
    h = jnp.maximum(x @ w1 + b1, 0.0)
    return h @ w2 + b2


if __name__ == "__main__":
    key = jax.random.PRNGKey(0)
    kx, k1, k2, k3, k4 = jax.random.split(key, 5)

    B, F_IN, HID, F_OUT = 8, 3, 64, 1
    x = jax.random.normal(kx, (B, F_IN), dtype=jnp.float32)

    # Deterministic parameter init (uniform like torch's default Linear init bounds).
    bound1 = 1.0 / (F_IN ** 0.5)
    bound2 = 1.0 / (HID ** 0.5)
    w1 = jax.random.uniform(k1, (F_IN, HID), jnp.float32, -bound1, bound1)
    b1 = jax.random.uniform(k2, (HID,), jnp.float32, -bound1, bound1)
    w2 = jax.random.uniform(k3, (HID, F_OUT), jnp.float32, -bound2, bound2)
    b2 = jax.random.uniform(k4, (F_OUT,), jnp.float32, -bound2, bound2)

    # Small batch (single 128-lane tile, exercises the Pallas path directly).
    out = stop_policy_net(x, w1, b1, w2, b2)
    jax.block_until_ready(out)
    ref = _reference(x, w1, b1, w2, b2)
    assert out.shape == (B, F_OUT)
    assert jnp.allclose(out, ref, atol=1e-5, rtol=1e-5)

    # Medium batch: exercises the ">=2 grid steps" clamp and lane padding.
    B2 = 3000
    x2 = jax.random.normal(kx, (B2, F_IN), dtype=jnp.float32)
    out2 = stop_policy_net(x2, w1, b1, w2, b2)
    jax.block_until_ready(out2)
    ref2 = _reference(x2, w1, b1, w2, b2)
    assert out2.shape == (B2, F_OUT)
    assert jnp.allclose(out2, ref2, atol=1e-5, rtol=1e-5)

    # Large batch: exercises the 16384-lane tile cap (multi-step grid).
    B3 = 40000
    x3 = jax.random.normal(kx, (B3, F_IN), dtype=jnp.float32)
    out3 = stop_policy_net(x3, w1, b1, w2, b2)
    jax.block_until_ready(out3)
    ref3 = _reference(x3, w1, b1, w2, b2)
    assert out3.shape == (B3, F_OUT)
    assert jnp.allclose(out3, ref3, atol=1e-5, rtol=1e-5)

    # Lane-dense entry point (caller keeps the (3, B) layout; no transpose pass).
    outT = stop_policy_net_t(x2.T, w1, b1, w2, b2)
    jax.block_until_ready(outT)
    assert outT.shape == (1, B2)
    assert jnp.allclose(outT[0].reshape(B2, 1), ref2, atol=1e-5, rtol=1e-5)

    print("KERNEL_OK")
</pallas_src>

<mosaic_0001>
module attributes {stable_mosaic.version = 11 : i64} {
  func.func @_mlp_kernel(%arg0: i32, %arg1: memref<3x128xf32, #tpu.memory_space<vmem>>, %arg2: memref<64x3xf32, #tpu.memory_space<vmem>>, %arg3: memref<64x1xf32, #tpu.memory_space<vmem>>, %arg4: memref<64x1xf32, #tpu.memory_space<vmem>>, %arg5: memref<1x1xf32, #tpu.memory_space<smem>>, %arg6: memref<1x128xf32, #tpu.memory_space<vmem>>) attributes {dimension_semantics = [#tpu.dimension_semantics<parallel>], iteration_bounds = array<i64: 1>, scalar_prefetch = 0 : i64, scratch_operands = 0 : i64, tpu.core_type = #tpu.core_type<tc>, window_params = [{transform_indices = @transform_0, window_bounds = array<i64: 3, 128>}, {pipeline_mode = #tpu.pipeline_mode<synchronous>, transform_indices = @transform_1, window_bounds = array<i64: 64, 3>}, {pipeline_mode = #tpu.pipeline_mode<synchronous>, transform_indices = @transform_2, window_bounds = array<i64: 64, 1>}, {pipeline_mode = #tpu.pipeline_mode<synchronous>, transform_indices = @transform_3, window_bounds = array<i64: 64, 1>}, {transform_indices = @transform_4, window_bounds = array<i64: 1, 1>}, {transform_indices = @transform_5, window_bounds = array<i64: 1, 128>}]} {
    %c0 = arith.constant 0 : index
    %c0_0 = arith.constant 0 : index
    %0 = vector.load %arg1[%c0, %c0_0] : memref<3x128xf32, #tpu.memory_space<vmem>>, vector<3x128xf32>
    %c0_1 = arith.constant 0 : index
    %c0_2 = arith.constant 0 : index
    %1 = vector.load %arg2[%c0_1, %c0_2] : memref<64x3xf32, #tpu.memory_space<vmem>>, vector<64x3xf32>
    %c0_3 = arith.constant 0 : index
    %c0_4 = arith.constant 0 : index
    %2 = vector.load %arg3[%c0_3, %c0_4] : memref<64x1xf32, #tpu.memory_space<vmem>>, vector<64x1xf32>
    %3 = vector.extract_strided_slice %1 {offsets = [0, 0], sizes = [64, 1], strides = [1, 1]} : vector<64x3xf32> to vector<64x1xf32>
    %4 = vector.extract_strided_slice %0 {offsets = [0, 0], sizes = [1, 128], strides = [1, 1]} : vector<3x128xf32> to vector<1x128xf32>
    %5 = vector.broadcast %3 : vector<64x1xf32> to vector<64x128xf32>
    %6 = vector.broadcast %4 : vector<1x128xf32> to vector<64x128xf32>
    %7 = arith.mulf %5, %6 : vector<64x128xf32>
    %8 = vector.broadcast %2 : vector<64x1xf32> to vector<64x128xf32>
    %9 = arith.addf %8, %7 : vector<64x128xf32>
    %10 = vector.extract_strided_slice %1 {offsets = [0, 1], sizes = [64, 1], strides = [1, 1]} : vector<64x3xf32> to vector<64x1xf32>
    %11 = vector.extract_strided_slice %0 {offsets = [1, 0], sizes = [1, 128], strides = [1, 1]} : vector<3x128xf32> to vector<1x128xf32>
    %12 = vector.broadcast %10 : vector<64x1xf32> to vector<64x128xf32>
    %13 = vector.broadcast %11 : vector<1x128xf32> to vector<64x128xf32>
    %14 = arith.mulf %12, %13 : vector<64x128xf32>
    %15 = arith.addf %9, %14 : vector<64x128xf32>
    %16 = vector.extract_strided_slice %1 {offsets = [0, 2], sizes = [64, 1], strides = [1, 1]} : vector<64x3xf32> to vector<64x1xf32>
    %17 = vector.extract_strided_slice %0 {offsets = [2, 0], sizes = [1, 128], strides = [1, 1]} : vector<3x128xf32> to vector<1x128xf32>
    %18 = vector.broadcast %16 : vector<64x1xf32> to vector<64x128xf32>
    %19 = vector.broadcast %17 : vector<1x128xf32> to vector<64x128xf32>
    %20 = arith.mulf %18, %19 : vector<64x128xf32>
    %21 = arith.addf %15, %20 : vector<64x128xf32>
    %cst = arith.constant 0.000000e+00 : f32
    %22 = vector.broadcast %cst : f32 to vector<64x128xf32>
    %23 = arith.maximumf %21, %22 : vector<64x128xf32>
    %c0_5 = arith.constant 0 : index
    %c0_6 = arith.constant 0 : index
    %24 = vector.load %arg4[%c0_5, %c0_6] : memref<64x1xf32, #tpu.memory_space<vmem>>, vector<64x1xf32>
    %25 = vector.broadcast %24 : vector<64x1xf32> to vector<64x128xf32>
    %26 = arith.mulf %23, %25 : vector<64x128xf32>
    %cst_7 = arith.constant dense<0.000000e+00> : vector<128xf32>
    %27 = vector.multi_reduction <add>, %26, %cst_7 [0] : vector<64x128xf32> to vector<128xf32>
    %28 = vector.shape_cast %27 : vector<128xf32> to vector<1x128xf32>
    %c0_8 = arith.constant 0 : index
    %c0_9 = arith.constant 0 : index
    %29 = memref.load %arg5[%c0_8, %c0_9] : memref<1x1xf32, #tpu.memory_space<smem>>
    %30 = vector.broadcast %29 : f32 to vector<1x128xf32>
    %31 = arith.addf %28, %30 : vector<1x128xf32>
    %c0_10 = arith.constant 0 : index
    %c0_11 = arith.constant 0 : index
    %32 = vector.load %arg6[%c0_10, %c0_11] : memref<1x128xf32, #tpu.memory_space<vmem>>, vector<1x128xf32>
    tpu.vector_store %arg6[%c0_10, %c0_11], %31 {strides = array<i32>} : memref<1x128xf32, #tpu.memory_space<vmem>>, vector<1x128xf32>,
    return
  }
  func.func @transform_0(%arg0: i32) -> (i32, i32) {
    %c0_i32 = arith.constant 0 : i32
    %c0_i32_0 = arith.constant 0 : i32
    return %c0_i32, %arg0 : i32, i32
  }
  func.func @transform_1(%arg0: i32) -> (i32, i32) {
    %c0_i32 = arith.constant 0 : i32
    %c0_i32_0 = arith.constant 0 : i32
    %c0_i32_1 = arith.constant 0 : i32
    return %c0_i32, %c0_i32_0 : i32, i32
  }
  func.func @transform_2(%arg0: i32) -> (i32, i32) {
    %c0_i32 = arith.constant 0 : i32
    %c0_i32_0 = arith.constant 0 : i32
    %c0_i32_1 = arith.constant 0 : i32
    return %c0_i32, %c0_i32_0 : i32, i32
  }
  func.func @transform_3(%arg0: i32) -> (i32, i32) {
    %c0_i32 = arith.constant 0 : i32
    %c0_i32_0 = arith.constant 0 : i32
    %c0_i32_1 = arith.constant 0 : i32
    return %c0_i32, %c0_i32_0 : i32, i32
  }
  func.func @transform_4(%arg0: i32) -> (i32, i32) {
    %c0_i32 = arith.constant 0 : i32
    %c0_i32_0 = arith.constant 0 : i32
    %c0_i32_1 = arith.constant 0 : i32
    return %c0_i32, %c0_i32_0 : i32, i32
  }
  func.func @transform_5(%arg0: i32) -> (i32, i32) {
    %c0_i32 = arith.constant 0 : i32
    %c0_i32_0 = arith.constant 0 : i32
    return %c0_i32, %arg0 : i32, i32
  }
}

</mosaic_0001>

<llo_original>
// kernel: tpu_custom_call.1
$region0: #{tpu_custom_call.1}
  #allocation0 [shape = 'u32[]', space=smem, size = 0x4, offset = 0x4, fixed_abs, tag = 'smem constant byte address 0x4 - core index']
  #allocation1 [shape = 'u32[72,128]{1,0:T(1,128)}', space=vmem, size = 0x9000, scoped, tag = 'internal scratch']
  #allocation2 [shape = 'f32[1,1]{1,0:T(1,128)S(6)}', space=smem, size = 0x200, scoped, tag = 'scoped memory for tpu_custom_call.1']
  %s0 = inlined_call_operand.vmem [shape: f32[3,128], index: 0, kind: input, shape index: {}]
  %s1 = inlined_call_operand.vmem [shape: f32[64,3], index: 1, kind: input, shape index: {}]
  %s2 = inlined_call_operand.vmem [shape: f32[64,1], index: 2, kind: input, shape index: {}]
  %s3 = inlined_call_operand.vmem [shape: f32[64,1], index: 3, kind: input, shape index: {}]
  %s4 = inlined_call_operand.<no memory space> [shape: f32[1,1], index: 4, kind: input, shape index: {}]
  %s5 = inlined_call_operand.hbm [shape: f32[1,128], index: 5, kind: output, shape index: {}]
  %s6 = sld [smem:[#allocation0]]
  $region30: #{tpu_custom_call.1} parent=0
    _
  %s8 = ssub.s32 1, %s6
  %s9 = scalar_select 0, %s8, %s6
  %10 = sst [smem:[#allocation2]] %s4
  $region1: #{tpu_custom_call.1} parent=0
    #allocation3 [shape = 'u8[512]{0}', space=vmem, size = 0x400, scoped, tag = 'output window, operand 0, single buffered']
    #allocation4 [shape = 's32[1]{0}', space=sflag, size = 0x4, scoped, tag = 'scoped memory for tpu_custom_call.1']
    %11 = vsyncpa [#allocation4], 0
    // Predicated region
    $region2: #{tpu_custom_call.1} parent=1 // pred_check
      _
    $region3: #{tpu_custom_call.1} parent=1 // pred_check_branch
      %13 = sbr.rel (0) target = $region5
    $region4: #{tpu_custom_call.1} parent=1 // pred_region
      _
    $region5: #{tpu_custom_call.1} parent=1 // pred_fallthru
      _
    // Predicated region
    $region6: #{tpu_custom_call.1} parent=1 // pred_check
      _
    $region7: #{tpu_custom_call.1} parent=1 // pred_check_branch
      %15 = sbr.rel (0) target = $region9
    $region8: #{tpu_custom_call.1} parent=1 // pred_region
      _
    $region9: #{tpu_custom_call.1} parent=1 // pred_fallthru
      _
    // Predicated region
    $region10: #{tpu_custom_call.1} parent=1 // pred_check
      _
    $region11: #{tpu_custom_call.1} parent=1 // pred_check_branch
      %17 = sbr.rel (0) target = $region13
    $region12: #{tpu_custom_call.1} parent=1 // pred_region
      _
    $region13: #{tpu_custom_call.1} parent=1 // pred_fallthru
      _
    // Predicated region
    $region14: #{tpu_custom_call.1} parent=1 // pred_check
      _
    $region15: #{tpu_custom_call.1} parent=1 // pred_check_branch
      %19 = sbr.rel (0) target = $region17
    $region16: #{tpu_custom_call.1} parent=1 // pred_region
      _
    $region17: #{tpu_custom_call.1} parent=1 // pred_fallthru
      _
    // Predicated region
    $region18: #{tpu_custom_call.1} parent=1 // pred_check
      _
    $region19: #{tpu_custom_call.1} parent=1 // pred_check_branch
      %21 = sbr.rel (0) target = $region21
    $region20: #{tpu_custom_call.1} parent=1 // pred_region
      _
    $region21: #{tpu_custom_call.1} parent=1 // pred_fallthru
      _
    %v22 = vld [vmem:[%s0] sm:$0x7]
    %v23 = vld [vmem:[%s1] sm:$0xff]
    %v24 = vld [vmem:[%s1 + $0x8] sm:$0xff]
    %v25 = vld [vmem:[%s1 + $0x10] sm:$0xff]
    %v26 = vld [vmem:[%s1 + $0x18] sm:$0xff]
    %v27 = vld [vmem:[%s1 + $0x20] sm:$0xff]
    %v28 = vld [vmem:[%s1 + $0x28] sm:$0xff]
    %v29 = vld [vmem:[%s1 + $0x30] sm:$0xff]
    %v30 = vld [vmem:[%s1 + $0x38] sm:$0xff]
    %v31 = vld [vmem:[%s2] sm:$0xff]
    %v32 = vld [vmem:[%s2 + $0x8] sm:$0xff]
    %v33 = vld [vmem:[%s2 + $0x10] sm:$0xff]
    %v34 = vld [vmem:[%s2 + $0x18] sm:$0xff]
    %v35 = vld [vmem:[%s2 + $0x20] sm:$0xff]
    %v36 = vld [vmem:[%s2 + $0x28] sm:$0xff]
    %v37 = vld [vmem:[%s2 + $0x30] sm:$0xff]
    %v38 = vld [vmem:[%s2 + $0x38] sm:$0xff]
    %40 = vset.pattern.permute.xlu0 0
    %41 = vperm.xlu0 %40, %v23
    %v42 = vpop.permute.xlu0 %41
    %45 = vset.pattern.permute.xlu0 0
    %46 = vperm.xlu0 %45, %v24
    %v47 = vpop.permute.xlu0 %46
    %50 = vset.pattern.permute.xlu0 0
    %51 = vperm.xlu0 %50, %v25
    %v52 = vpop.permute.xlu0 %51
    %55 = vset.pattern.permute.xlu0 0
    %56 = vperm.xlu0 %55, %v26
    %v57 = vpop.permute.xlu0 %56
    %60 = vset.pattern.permute.xlu0 0
    %61 = vperm.xlu0 %60, %v27
    %v62 = vpop.permute.xlu0 %61
    %65 = vset.pattern.permute.xlu0 0
    %66 = vperm.xlu0 %65, %v28
    %v67 = vpop.permute.xlu0 %66
    %70 = vset.pattern.permute.xlu0 0
    %71 = vperm.xlu0 %70, %v29
    %v72 = vpop.permute.xlu0 %71
    %75 = vset.pattern.permute.xlu0 0
    %76 = vperm.xlu0 %75, %v30
    %v77 = vpop.permute.xlu0 %76
    %v79 = vperm.slane %v22, 0
    %v80 = vmul.f32 %v42, %v79
    %v81 = vmul.f32 %v47, %v79
    %v82 = vmul.f32 %v52, %v79
    %v83 = vmul.f32 %v57, %v79
    %v84 = vmul.f32 %v62, %v79
    %v85 = vmul.f32 %v67, %v79
    %v86 = vmul.f32 %v72, %v79
    %v87 = vmul.f32 %v77, %v79
    %89 = vset.pattern.permute.xlu0 0
    %90 = vperm.xlu0 %89, %v31
    %v91 = vpop.permute.xlu0 %90
    %94 = vset.pattern.permute.xlu0 0
    %95 = vperm.xlu0 %94, %v32
    %v96 = vpop.permute.xlu0 %95
    %99 = vset.pattern.permute.xlu0 0
    %100 = vperm.xlu0 %99, %v33
    %v101 = vpop.permute.xlu0 %100
    %104 = vset.pattern.permute.xlu0 0
    %105 = vperm.xlu0 %104, %v34
    %v106 = vpop.permute.xlu0 %105
    %109 = vset.pattern.permute.xlu0 0
    %110 = vperm.xlu0 %109, %v35
    %v111 = vpop.permute.xlu0 %110
    %114 = vset.pattern.permute.xlu0 0
    %115 = vperm.xlu0 %114, %v36
    %v116 = vpop.permute.xlu0 %115
    %119 = vset.pattern.permute.xlu0 0
    %120 = vperm.xlu0 %119, %v37
    %v121 = vpop.permute.xlu0 %120
    %124 = vset.pattern.permute.xlu0 0
    %125 = vperm.xlu0 %124, %v38
    %v126 = vpop.permute.xlu0 %125
    %v128 = vadd.f32 %v91, %v80
    %v129 = vadd.f32 %v96, %v81
    %v130 = vadd.f32 %v101, %v82
    %v131 = vadd.f32 %v106, %v83
    %v132 = vadd.f32 %v111, %v84
    %v133 = vadd.f32 %v116, %v85
    %v134 = vadd.f32 %v121, %v86
    %v135 = vadd.f32 %v126, %v87
    %136 = vset.pattern.permute.xlu0 1
    %137 = vperm.xlu0 %136, %v23
    %v138 = vpop.permute.xlu0 %137
    %140 = vset.pattern.permute.xlu0 1
    %141 = vperm.xlu0 %140, %v24
    %v142 = vpop.permute.xlu0 %141
    %144 = vset.pattern.permute.xlu0 1
    %145 = vperm.xlu0 %144, %v25
    %v146 = vpop.permute.xlu0 %145
    %148 = vset.pattern.permute.xlu0 1
    %149 = vperm.xlu0 %148, %v26
    %v150 = vpop.permute.xlu0 %149
    %152 = vset.pattern.permute.xlu0 1
    %153 = vperm.xlu0 %152, %v27
    %v154 = vpop.permute.xlu0 %153
    %156 = vset.pattern.permute.xlu0 1
    %157 = vperm.xlu0 %156, %v28
    %v158 = vpop.permute.xlu0 %157
    %160 = vset.pattern.permute.xlu0 1
    %161 = vperm.xlu0 %160, %v29
    %v162 = vpop.permute.xlu0 %161
    %164 = vset.pattern.permute.xlu0 1
    %165 = vperm.xlu0 %164, %v30
    %v166 = vpop.permute.xlu0 %165
    %v168 = vperm.slane %v22, 1
    %v169 = vmul.f32 %v138, %v168
    %v170 = vmul.f32 %v142, %v168
    %v171 = vmul.f32 %v146, %v168
    %v172 = vmul.f32 %v150, %v168
    %v173 = vmul.f32 %v154, %v168
    %v174 = vmul.f32 %v158, %v168
    %v175 = vmul.f32 %v162, %v168
    %v176 = vmul.f32 %v166, %v168
    %v177 = vadd.f32 %v128, %v169
    %v178 = vadd.f32 %v129, %v170
    %v179 = vadd.f32 %v130, %v171
    %v180 = vadd.f32 %v131, %v172
    %v181 = vadd.f32 %v132, %v173
    %v182 = vadd.f32 %v133, %v174
    %v183 = vadd.f32 %v134, %v175
    %v184 = vadd.f32 %v135, %v176
    %185 = vset.pattern.permute.xlu0 2
    %186 = vperm.xlu0 %185, %v23
    %v187 = vpop.permute.xlu0 %186
    %189 = vset.pattern.permute.xlu0 2
    %190 = vperm.xlu0 %189, %v24
    %v191 = vpop.permute.xlu0 %190
    %193 = vset.pattern.permute.xlu0 2
    %194 = vperm.xlu0 %193, %v25
    %v195 = vpop.permute.xlu0 %194
    %197 = vset.pattern.permute.xlu0 2
    %198 = vperm.xlu0 %197, %v26
    %v199 = vpop.permute.xlu0 %198
    %201 = vset.pattern.permute.xlu0 2
    %202 = vperm.xlu0 %201, %v27
    %v203 = vpop.permute.xlu0 %202
    %205 = vset.pattern.permute.xlu0 2
    %206 = vperm.xlu0 %205, %v28
    %v207 = vpop.permute.xlu0 %206
    %209 = vset.pattern.permute.xlu0 2
    %210 = vperm.xlu0 %209, %v29
    %v211 = vpop.permute.xlu0 %210
    %213 = vset.pattern.permute.xlu0 2
    %214 = vperm.xlu0 %213, %v30
    %v215 = vpop.permute.xlu0 %214
    %v217 = vperm.slane %v22, 2
    %v218 = vmul.f32 %v187, %v217
    %v219 = vmul.f32 %v191, %v217
    %v220 = vmul.f32 %v195, %v217
    %v221 = vmul.f32 %v199, %v217
    %v222 = vmul.f32 %v203, %v217
    %v223 = vmul.f32 %v207, %v217
    %v224 = vmul.f32 %v211, %v217
    %v225 = vmul.f32 %v215, %v217
    %v226 = vadd.f32 %v177, %v218
    %v227 = vadd.f32 %v178, %v219
    %v228 = vadd.f32 %v179, %v220
    %v229 = vadd.f32 %v180, %v221
    %v230 = vadd.f32 %v181, %v222
    %v231 = vadd.f32 %v182, %v223
    %v232 = vadd.f32 %v183, %v224
    %v233 = vadd.f32 %v184, %v225
    %v234 = vmax.f32 %v226, 0.0
    %v235 = vmax.f32 %v227, 0.0
    %v236 = vmax.f32 %v228, 0.0
    %v237 = vmax.f32 %v229, 0.0
    %v238 = vmax.f32 %v230, 0.0
    %v239 = vmax.f32 %v231, 0.0
    %v240 = vmax.f32 %v232, 0.0
    %v241 = vmax.f32 %v233, 0.0
    %v242 = vld [vmem:[%s3] sm:$0xff]
    %v243 = vld [vmem:[%s3 + $0x8] sm:$0xff]
    %v244 = vld [vmem:[%s3 + $0x10] sm:$0xff]
    %v245 = vld [vmem:[%s3 + $0x18] sm:$0xff]
    %v246 = vld [vmem:[%s3 + $0x20] sm:$0xff]
    %v247 = vld [vmem:[%s3 + $0x28] sm:$0xff]
    %v248 = vld [vmem:[%s3 + $0x30] sm:$0xff]
    %v249 = vld [vmem:[%s3 + $0x38] sm:$0xff]
    %251 = vset.pattern.permute.xlu0 0
    %252 = vperm.xlu0 %251, %v242
    %v253 = vpop.permute.xlu0 %252
    %256 = vset.pattern.permute.xlu0 0
    %257 = vperm.xlu0 %256, %v243
    %v258 = vpop.permute.xlu0 %257
    %261 = vset.pattern.permute.xlu0 0
    %262 = vperm.xlu0 %261, %v244
    %v263 = vpop.permute.xlu0 %262
    %266 = vset.pattern.permute.xlu0 0
    %267 = vperm.xlu0 %266, %v245
    %v268 = vpop.permute.xlu0 %267
    %271 = vset.pattern.permute.xlu0 0
    %272 = vperm.xlu0 %271, %v246
    %v273 = vpop.permute.xlu0 %272
    %276 = vset.pattern.permute.xlu0 0
    %277 = vperm.xlu0 %276, %v247
    %v278 = vpop.permute.xlu0 %277
    %281 = vset.pattern.permute.xlu0 0
    %282 = vperm.xlu0 %281, %v248
    %v283 = vpop.permute.xlu0 %282
    %286 = vset.pattern.permute.xlu0 0
    %287 = vperm.xlu0 %286, %v249
    %v288 = vpop.permute.xlu0 %287
    %v290 = vmul.f32 %v234, %v253
    %v291 = vmul.f32 %v235, %v258
    %v292 = vmul.f32 %v236, %v263
    %v293 = vmul.f32 %v237, %v268
    %v294 = vmul.f32 %v238, %v273
    %v295 = vmul.f32 %v239, %v278
    %v296 = vmul.f32 %v240, %v283
    %v297 = vmul.f32 %v241, %v288
    %v298 = vadd.f32 %v290, %v291
    %v299 = vadd.f32 %v298, %v292
    %v300 = vadd.f32 %v299, %v293
    %v301 = vadd.f32 %v300, %v294
    %v302 = vadd.f32 %v301, %v295
    %v303 = vadd.f32 %v302, %v296
    %v304 = vadd.f32 %v303, %v297
    %v305 = vrot.slane %v304, 4
    %v306 = vadd.f32 %v304, %v305
    %v307 = vrot.slane %v306, 2
    %v308 = vadd.f32 %v306, %v307
    %v309 = vrot.slane %v308, 1
    %v310 = vadd.f32 %v308, %v309
    %s311 = sld [smem:[#allocation2]]
    %v312 = vstv %s311
    %v313 = vadd.f32 %v310, %v312
    %314 = vst [vmem:[#allocation3] sm:$0x1] %v313
    // Predicated region
    $region22: #{tpu_custom_call.1} parent=1 // pred_check
      _
    $region23: #{tpu_custom_call.1} parent=1 // pred_check_branch
      %316 = sbr.rel (0) target = $region25
    $region24: #{tpu_custom_call.1} parent=1 // pred_region
      %318 = vsyncadd [#allocation4], 0
      %s320 = sshll.u32 [#allocation3], 4
      %s321 = int_to_ptr.vmem [resolvable:$true] %s320
      %s322 = sshll.u32 %s5, 4
      %s323 = int_to_ptr.hbm [resolvable:$true] %s322
      %325 = dma.vmem_to_hbm [thread:$0]  %s321, 16, %s323, [#allocation4]
    $region25: #{tpu_custom_call.1} parent=1 // pred_fallthru
      _
    // Predicated region
    $region26: #{tpu_custom_call.1} parent=1 // pred_check
      _
    $region27: #{tpu_custom_call.1} parent=1 // pred_check_branch
      %327 = sbr.rel (0) target = $region29
    $region28: #{tpu_custom_call.1} parent=1 // pred_region
      %329 = dma.done [#allocation4], 16
    $region29: #{tpu_custom_call.1} parent=1 // pred_fallthru
      _
    %330 = vsyncpa [#allocation4], 1

</llo_original>
